<compile_context>
chip_gen: v7x
topology: tpu7x:2x2x1
jax: 0.10.0
libtpu: 0.0.40
codegen_flags: <defaults>
</compile_context>

<pallas_src>
import functools
import math

import jax
import jax.numpy as jnp
from jax.experimental import pallas as pl
from jax.experimental.pallas import tpu as pltpu


def _sepconv2d_kernel(x_ref, wd_ref, wp_ref, bp_ref, o_ref, *,
                      k, dilation, w_pad, l_out, n_img, c_in, use_mxu):
    """One grid step: n_img images packed along the sublane axis.

    x_ref:  (1, n_img*c_in, L_in)   zero-padded NCHW input, H/W flattened into lanes
    wd_ref: (n_img*c_in, k*k)       depthwise taps (BN scale folded), tiled per image
    wp_ref: (Cout, c_in)            pointwise 1x1 weight
    bp_ref: (Cout, 1)               pointwise bias (BN shift + depthwise bias folded)
    o_ref:  (1, n_img*Cout, l_out)  flat output rows; l_out is a multiple of 128 lanes
    """
    x = x_ref[0]                 # (n_img*c_in, L_in)
    wd = wd_ref[...]             # hoisted: loaded once, reused by every tap
    wp = wp_ref[...]
    bp = bp_ref[...]
    c_out = wp.shape[0]

    # Depthwise conv: k*k static lane-offset slices + FMAs on the flat layout; every
    # tap is a pure lane shift (no sublane relayout).
    # TODO(synk): if bundle dumps show these unaligned slices materializing VMEM copies,
    # group taps by column offset (k rotations instead of k*k slices).
    acc = x[:, 0:l_out] * wd[:, 0:1]
    for t in range(1, k * k):
        i, j = divmod(t, k)
        off = (i * w_pad + j) * dilation
        acc = acc + x[:, off:off + l_out] * wd[:, t:t + 1]

    # Pointwise 1x1 conv over channels, per packed image.  Bias is folded into the
    # first FMA / the dot epilogue (no separate full-width +bias pass).
    for g in range(n_img):
        a_g = acc[g * c_in:(g + 1) * c_in, :]              # (c_in, l_out)
        if use_mxu:
            # Large C: MXU contraction; bf16 operands, f32 accumulation (v6e/v7x).
            y = jnp.dot(wp.astype(jnp.bfloat16), a_g.astype(jnp.bfloat16),
                        preferred_element_type=jnp.float32) + bp
        else:
            # Tiny C: Cout x C lane-dense broadcast-FMAs on the VPU (MXU would run at
            # ~C/256 utilization).
            y = wp[:, 0:1] * a_g[0:1, :] + bp
            for c in range(1, c_in):
                y = y + wp[:, c:c + 1] * a_g[c:c + 1, :]
        o_ref[0, g * c_out:(g + 1) * c_out, :] = y.astype(o_ref.dtype)


def _pick_imgs_per_block(n, c, per_img_bytes):
    """Images folded into one block: fill sublanes, hit a few-MiB block, keep grid>=2."""
    budget = 8 * 2 ** 20                                       # per buffer set; x2 buffers + temps << 48 MiB
    cap = max(1, min(budget // max(per_img_bytes, 1), 64))     # 64 bounds pointwise unroll
    sub = 8 // math.gcd(c, 8)                                  # imgs so imgs*c fills 8 f32 sublanes
    best, best_score = 1, None
    for d in range(1, n + 1):
        if n % d or d > cap:
            continue
        score = (d % sub == 0,                                  # full-sublane packing
                 (n // d) >= 2 or n < 2 * sub,                  # >=2 grid steps for v7x dual-TC
                 d)                                             # then as large as possible
        if best_score is None or score > best_score:
            best, best_score = d, score
    return best


def sep_conv2d(x_nchw, params, *, kernel_size, stride=1, padding=0, dilation=1,
               eps=1e-5):
    """Pallas SepConv2d forward (BN in eval mode). (N,C,H,W) f32 -> (N,Cout,Ho,Wo)."""
    assert stride == 1, "Pallas kernel implemented for stride=1"  # TODO(synk): strided output gather
    wd, bd, gamma, beta, running_mean, running_var, wp, bp = params
    N, C, H, W = x_nchw.shape
    Cout = wp.shape[0]
    k = kernel_size
    Hp, Wp = H + 2 * padding, W + 2 * padding
    halo = dilation * (k - 1)
    Ho, Wo = Hp - halo, Wp - halo
    assert Ho > 0 and Wo > 0, "non-positive output size for this kernel/pad/dilation"

    # ---- fold depthwise bias + BatchNorm(eval) into the conv weights / pointwise bias ----
    inv_std = 1.0 / jnp.sqrt(running_var + eps)
    scale = gamma * inv_std                                         # (C,)
    shift = (bd - running_mean) * scale + beta                      # (C,)
    wd_flat = wd[:, 0, :, :].reshape(C, k * k) * scale[:, None]     # (C, k*k), BN scale folded
    wp_mat = wp[:, :, 0, 0]                                         # (Cout, C)
    bp_col = (wp_mat @ shift + bp).reshape(Cout, 1)                 # (Cout, 1), BN shift folded

    # ---- flat-spatial geometry: lane-aligned output, slack rows so every tap shift is in-bounds ----
    L_acc = Ho * Wp                                                 # real flat output rows (Wp pitch)
    L_out = -(-L_acc // 128) * 128                                  # pad to 128 lanes -> unmasked vst
    L_need = halo * (Wp + 1) + L_out                                # max flat read index + 1
    extra_rows = max(0, -(-(L_need - Hp * Wp) // Wp))
    H_ext = Hp + extra_rows
    L_in = H_ext * Wp

    # ---- pack images into the sublane axis; batch-tile into few-MiB blocks ----
    per_img_bytes = (C * L_in + Cout * L_out) * 4
    imgs = _pick_imgs_per_block(N, C, per_img_bytes)
    NB = N // imgs
    M_in, M_out = imgs * C, imgs * Cout
    wd_tiled = jnp.tile(wd_flat, (imgs, 1))                         # (imgs*C, k*k)

    # TODO(synk): replace the wrapper-side jnp.pad (one extra HBM input pass) with an
    # in-kernel DMA of the unpadded rows into a zero-initialized VMEM scratch.
    x_pad = jnp.pad(x_nchw, ((0, 0), (0, 0),
                             (padding, padding + extra_rows),
                             (padding, padding)))
    x_flat = x_pad.reshape(NB, M_in, L_in)      # contiguous reshape (N and C are adjacent)

    use_mxu = C >= 128
    kernel = functools.partial(_sepconv2d_kernel, k=k, dilation=dilation, w_pad=Wp,
                               l_out=L_out, n_img=imgs, c_in=C, use_mxu=use_mxu)

    # VMEM budget: double-buffered in+out blocks + accumulator / tap-slice temporaries.
    in_bytes = M_in * L_in * 4
    out_bytes = M_out * L_out * 4
    acc_bytes = M_in * L_out * 4
    vmem_needed = 2 * (in_bytes + out_bytes) + 3 * acc_bytes + (1 << 20)
    vmem_limit = int(min(max(vmem_needed, 32 * 2 ** 20), 64 * 2 ** 20))

    # TODO(synk): for single images too large for VMEM (esp. v7x's 64 MiB/TC), tile the
    # flat spatial axis with a halo'd manual double-buffer (memory_space=pl.ANY).
    out_flat = pl.pallas_call(
        kernel,
        out_shape=jax.ShapeDtypeStruct((NB, M_out, L_out), x_nchw.dtype),
        grid=(NB,),
        in_specs=[
            pl.BlockSpec((1, M_in, L_in), lambda n: (n, 0, 0)),
            pl.BlockSpec((M_in, k * k), lambda n: (0, 0)),
            pl.BlockSpec((Cout, C), lambda n: (0, 0)),
            pl.BlockSpec((Cout, 1), lambda n: (0, 0)),
        ],
        out_specs=pl.BlockSpec((1, M_out, L_out), lambda n: (n, 0, 0)),
        # batch axis is parallel -> sharded over both v7x TensorCores when NB >= 2
        compiler_params=pltpu.CompilerParams(
            dimension_semantics=("parallel",),
            vmem_limit_bytes=vmem_limit),
    )(x_flat, wd_tiled, wp_mat, bp_col)

    # Contiguous un-pack reshape; lane-slack and per-row halo-gap columns are dropped
    # in one fused XLA copy.  TODO(synk): fuse this crop into the consumer to drop the pass.
    out = out_flat.reshape(N, Cout, L_out)[:, :, :L_acc]
    return out.reshape(N, Cout, Ho, Wp)[:, :, :, :Wo]


def sep_conv2d_reference(x, params, *, kernel_size, stride=1, padding=0,
                         dilation=1, eps=1e-5):
    """Pure-JAX reference matching the PyTorch module (BN in eval mode)."""
    wd, bd, gamma, beta, mu, var, wp, bp = params
    C = x.shape[1]
    dw = jax.lax.conv_general_dilated(
        x, wd, window_strides=(stride, stride),
        padding=[(padding, padding), (padding, padding)],
        rhs_dilation=(dilation, dilation),
        dimension_numbers=("NCHW", "OIHW", "NCHW"),
        feature_group_count=C)
    dw = dw + bd[None, :, None, None]
    bn = ((dw - mu[None, :, None, None])
          * (gamma / jnp.sqrt(var + eps))[None, :, None, None]
          + beta[None, :, None, None])
    pw = jax.lax.conv_general_dilated(
        bn, wp, window_strides=(1, 1), padding="VALID",
        dimension_numbers=("NCHW", "OIHW", "NCHW"))
    return pw + bp[None, :, None, None]


if __name__ == "__main__":
    key = jax.random.PRNGKey(0)
    N, C, H, W = 2, 4, 16, 16
    Cout, k, stride, padding, dilation = 8, 3, 1, 1, 1

    keys = jax.random.split(key, 9)
    x = jax.random.normal(keys[0], (N, C, H, W), jnp.float32)
    # deterministic synthetic parameters (shapes per nn.Conv2d / nn.BatchNorm2d)
    wd = 0.2 * jax.random.normal(keys[1], (C, 1, k, k), jnp.float32)       # depthwise weight
    bd = 0.1 * jax.random.normal(keys[2], (C,), jnp.float32)               # depthwise bias
    gamma = 1.0 + 0.1 * jax.random.normal(keys[3], (C,), jnp.float32)      # BN weight
    beta = 0.1 * jax.random.normal(keys[4], (C,), jnp.float32)             # BN bias
    running_mean = 0.1 * jax.random.normal(keys[5], (C,), jnp.float32)
    running_var = jax.random.uniform(keys[6], (C,), jnp.float32, 0.5, 1.5)
    wp = 0.2 * jax.random.normal(keys[7], (Cout, C, 1, 1), jnp.float32)    # pointwise weight
    bp = 0.1 * jax.random.normal(keys[8], (Cout,), jnp.float32)            # pointwise bias
    params = (wd, bd, gamma, beta, running_mean, running_var, wp, bp)

    out = sep_conv2d(x, params, kernel_size=k, stride=stride,
                     padding=padding, dilation=dilation)
    out = jax.block_until_ready(out)

    ref = sep_conv2d_reference(x, params, kernel_size=k, stride=stride,
                               padding=padding, dilation=dilation)
    assert out.shape == ref.shape == (N, Cout, H, W)
    max_err = float(jnp.max(jnp.abs(out - ref)))
    assert jnp.allclose(out, ref, rtol=1e-4, atol=1e-4), f"max_err={max_err}"
    print("KERNEL_OK")
</pallas_src>

<mosaic_0001>
module attributes {stable_mosaic.version = 11 : i64} {
  func.func @_sepconv2d_kernel(%arg0: i32, %arg1: memref<1x8x432xf32, #tpu.memory_space<vmem>>, %arg2: memref<8x9xf32, #tpu.memory_space<vmem>>, %arg3: memref<8x4xf32, #tpu.memory_space<vmem>>, %arg4: memref<8x1xf32, #tpu.memory_space<vmem>>, %arg5: memref<1x16x384xf32, #tpu.memory_space<vmem>>) attributes {dimension_semantics = [#tpu.dimension_semantics<parallel>], iteration_bounds = array<i64: 1>, scalar_prefetch = 0 : i64, scratch_operands = 0 : i64, tpu.core_type = #tpu.core_type<tc>, window_params = [{transform_indices = @transform_0, window_bounds = array<i64: 1, 8, 432>}, {pipeline_mode = #tpu.pipeline_mode<synchronous>, transform_indices = @transform_1, window_bounds = array<i64: 8, 9>}, {pipeline_mode = #tpu.pipeline_mode<synchronous>, transform_indices = @transform_2, window_bounds = array<i64: 8, 4>}, {pipeline_mode = #tpu.pipeline_mode<synchronous>, transform_indices = @transform_3, window_bounds = array<i64: 8, 1>}, {transform_indices = @transform_4, window_bounds = array<i64: 1, 16, 384>}]} {
    %c0 = arith.constant 0 : index
    %c0_0 = arith.constant 0 : index
    %c0_1 = arith.constant 0 : index
    %0 = vector.load %arg1[%c0, %c0_0, %c0_1] : memref<1x8x432xf32, #tpu.memory_space<vmem>>, vector<1x8x432xf32>
    %1 = vector.shape_cast %0 : vector<1x8x432xf32> to vector<8x432xf32>
    %c0_2 = arith.constant 0 : index
    %c0_3 = arith.constant 0 : index
    %2 = vector.load %arg2[%c0_2, %c0_3] : memref<8x9xf32, #tpu.memory_space<vmem>>, vector<8x9xf32>
    %c0_4 = arith.constant 0 : index
    %c0_5 = arith.constant 0 : index
    %3 = vector.load %arg3[%c0_4, %c0_5] : memref<8x4xf32, #tpu.memory_space<vmem>>, vector<8x4xf32>
    %c0_6 = arith.constant 0 : index
    %c0_7 = arith.constant 0 : index
    %4 = vector.load %arg4[%c0_6, %c0_7] : memref<8x1xf32, #tpu.memory_space<vmem>>, vector<8x1xf32>
    %5 = vector.extract_strided_slice %1 {offsets = [0, 0], sizes = [8, 384], strides = [1, 1]} : vector<8x432xf32> to vector<8x384xf32>
    %6 = vector.extract_strided_slice %2 {offsets = [0, 0], sizes = [8, 1], strides = [1, 1]} : vector<8x9xf32> to vector<8x1xf32>
    %7 = vector.broadcast %6 : vector<8x1xf32> to vector<8x384xf32>
    %8 = arith.mulf %5, %7 : vector<8x384xf32>
    %9 = vector.extract_strided_slice %1 {offsets = [0, 1], sizes = [8, 384], strides = [1, 1]} : vector<8x432xf32> to vector<8x384xf32>
    %10 = vector.extract_strided_slice %2 {offsets = [0, 1], sizes = [8, 1], strides = [1, 1]} : vector<8x9xf32> to vector<8x1xf32>
    %11 = vector.broadcast %10 : vector<8x1xf32> to vector<8x384xf32>
    %12 = arith.mulf %9, %11 : vector<8x384xf32>
    %13 = arith.addf %8, %12 : vector<8x384xf32>
    %14 = vector.extract_strided_slice %1 {offsets = [0, 2], sizes = [8, 384], strides = [1, 1]} : vector<8x432xf32> to vector<8x384xf32>
    %15 = vector.extract_strided_slice %2 {offsets = [0, 2], sizes = [8, 1], strides = [1, 1]} : vector<8x9xf32> to vector<8x1xf32>
    %16 = vector.broadcast %15 : vector<8x1xf32> to vector<8x384xf32>
    %17 = arith.mulf %14, %16 : vector<8x384xf32>
    %18 = arith.addf %13, %17 : vector<8x384xf32>
    %19 = vector.extract_strided_slice %1 {offsets = [0, 18], sizes = [8, 384], strides = [1, 1]} : vector<8x432xf32> to vector<8x384xf32>
    %20 = vector.extract_strided_slice %2 {offsets = [0, 3], sizes = [8, 1], strides = [1, 1]} : vector<8x9xf32> to vector<8x1xf32>
    %21 = vector.broadcast %20 : vector<8x1xf32> to vector<8x384xf32>
    %22 = arith.mulf %19, %21 : vector<8x384xf32>
    %23 = arith.addf %18, %22 : vector<8x384xf32>
    %24 = vector.extract_strided_slice %1 {offsets = [0, 19], sizes = [8, 384], strides = [1, 1]} : vector<8x432xf32> to vector<8x384xf32>
    %25 = vector.extract_strided_slice %2 {offsets = [0, 4], sizes = [8, 1], strides = [1, 1]} : vector<8x9xf32> to vector<8x1xf32>
    %26 = vector.broadcast %25 : vector<8x1xf32> to vector<8x384xf32>
    %27 = arith.mulf %24, %26 : vector<8x384xf32>
    %28 = arith.addf %23, %27 : vector<8x384xf32>
    %29 = vector.extract_strided_slice %1 {offsets = [0, 20], sizes = [8, 384], strides = [1, 1]} : vector<8x432xf32> to vector<8x384xf32>
    %30 = vector.extract_strided_slice %2 {offsets = [0, 5], sizes = [8, 1], strides = [1, 1]} : vector<8x9xf32> to vector<8x1xf32>
    %31 = vector.broadcast %30 : vector<8x1xf32> to vector<8x384xf32>
    %32 = arith.mulf %29, %31 : vector<8x384xf32>
    %33 = arith.addf %28, %32 : vector<8x384xf32>
    %34 = vector.extract_strided_slice %1 {offsets = [0, 36], sizes = [8, 384], strides = [1, 1]} : vector<8x432xf32> to vector<8x384xf32>
    %35 = vector.extract_strided_slice %2 {offsets = [0, 6], sizes = [8, 1], strides = [1, 1]} : vector<8x9xf32> to vector<8x1xf32>
    %36 = vector.broadcast %35 : vector<8x1xf32> to vector<8x384xf32>
    %37 = arith.mulf %34, %36 : vector<8x384xf32>
    %38 = arith.addf %33, %37 : vector<8x384xf32>
    %39 = vector.extract_strided_slice %1 {offsets = [0, 37], sizes = [8, 384], strides = [1, 1]} : vector<8x432xf32> to vector<8x384xf32>
    %40 = vector.extract_strided_slice %2 {offsets = [0, 7], sizes = [8, 1], strides = [1, 1]} : vector<8x9xf32> to vector<8x1xf32>
    %41 = vector.broadcast %40 : vector<8x1xf32> to vector<8x384xf32>
    %42 = arith.mulf %39, %41 : vector<8x384xf32>
    %43 = arith.addf %38, %42 : vector<8x384xf32>
    %44 = vector.extract_strided_slice %1 {offsets = [0, 38], sizes = [8, 384], strides = [1, 1]} : vector<8x432xf32> to vector<8x384xf32>
    %45 = vector.extract_strided_slice %2 {offsets = [0, 8], sizes = [8, 1], strides = [1, 1]} : vector<8x9xf32> to vector<8x1xf32>
    %46 = vector.broadcast %45 : vector<8x1xf32> to vector<8x384xf32>
    %47 = arith.mulf %44, %46 : vector<8x384xf32>
    %48 = arith.addf %43, %47 : vector<8x384xf32>
    %49 = vector.extract_strided_slice %48 {offsets = [0, 0], sizes = [4, 384], strides = [1, 1]} : vector<8x384xf32> to vector<4x384xf32>
    %50 = vector.extract_strided_slice %3 {offsets = [0, 0], sizes = [8, 1], strides = [1, 1]} : vector<8x4xf32> to vector<8x1xf32>
    %51 = vector.extract_strided_slice %49 {offsets = [0, 0], sizes = [1, 384], strides = [1, 1]} : vector<4x384xf32> to vector<1x384xf32>
    %52 = vector.broadcast %50 : vector<8x1xf32> to vector<8x384xf32>
    %53 = vector.broadcast %51 : vector<1x384xf32> to vector<8x384xf32>
    %54 = arith.mulf %52, %53 : vector<8x384xf32>
    %55 = vector.broadcast %4 : vector<8x1xf32> to vector<8x384xf32>
    %56 = arith.addf %54, %55 : vector<8x384xf32>
    %57 = vector.extract_strided_slice %3 {offsets = [0, 1], sizes = [8, 1], strides = [1, 1]} : vector<8x4xf32> to vector<8x1xf32>
    %58 = vector.extract_strided_slice %49 {offsets = [1, 0], sizes = [1, 384], strides = [1, 1]} : vector<4x384xf32> to vector<1x384xf32>
    %59 = vector.broadcast %57 : vector<8x1xf32> to vector<8x384xf32>
    %60 = vector.broadcast %58 : vector<1x384xf32> to vector<8x384xf32>
    %61 = arith.mulf %59, %60 : vector<8x384xf32>
    %62 = arith.addf %56, %61 : vector<8x384xf32>
    %63 = vector.extract_strided_slice %3 {offsets = [0, 2], sizes = [8, 1], strides = [1, 1]} : vector<8x4xf32> to vector<8x1xf32>
    %64 = vector.extract_strided_slice %49 {offsets = [2, 0], sizes = [1, 384], strides = [1, 1]} : vector<4x384xf32> to vector<1x384xf32>
    %65 = vector.broadcast %63 : vector<8x1xf32> to vector<8x384xf32>
    %66 = vector.broadcast %64 : vector<1x384xf32> to vector<8x384xf32>
    %67 = arith.mulf %65, %66 : vector<8x384xf32>
    %68 = arith.addf %62, %67 : vector<8x384xf32>
    %69 = vector.extract_strided_slice %3 {offsets = [0, 3], sizes = [8, 1], strides = [1, 1]} : vector<8x4xf32> to vector<8x1xf32>
    %70 = vector.extract_strided_slice %49 {offsets = [3, 0], sizes = [1, 384], strides = [1, 1]} : vector<4x384xf32> to vector<1x384xf32>
    %71 = vector.broadcast %69 : vector<8x1xf32> to vector<8x384xf32>
    %72 = vector.broadcast %70 : vector<1x384xf32> to vector<8x384xf32>
    %73 = arith.mulf %71, %72 : vector<8x384xf32>
    %74 = arith.addf %68, %73 : vector<8x384xf32>
    %c0_8 = arith.constant 0 : index
    %c0_9 = arith.constant 0 : index
    %c0_10 = arith.constant 0 : index
    %75 = vector.load %arg5[%c0_8, %c0_9, %c0_10] : memref<1x16x384xf32, #tpu.memory_space<vmem>>, vector<1x8x384xf32>
    %76 = vector.shape_cast %75 : vector<1x8x384xf32> to vector<8x384xf32>
    %77 = vector.shape_cast %74 : vector<8x384xf32> to vector<1x8x384xf32>
    tpu.vector_store %arg5[%c0_8, %c0_9, %c0_10], %77 {strides = array<i32>} : memref<1x16x384xf32, #tpu.memory_space<vmem>>, vector<1x8x384xf32>,
    %78 = vector.extract_strided_slice %48 {offsets = [4, 0], sizes = [4, 384], strides = [1, 1]} : vector<8x384xf32> to vector<4x384xf32>
    %79 = vector.extract_strided_slice %3 {offsets = [0, 0], sizes = [8, 1], strides = [1, 1]} : vector<8x4xf32> to vector<8x1xf32>
    %80 = vector.extract_strided_slice %78 {offsets = [0, 0], sizes = [1, 384], strides = [1, 1]} : vector<4x384xf32> to vector<1x384xf32>
    %81 = vector.broadcast %79 : vector<8x1xf32> to vector<8x384xf32>
    %82 = vector.broadcast %80 : vector<1x384xf32> to vector<8x384xf32>
    %83 = arith.mulf %81, %82 : vector<8x384xf32>
    %84 = vector.broadcast %4 : vector<8x1xf32> to vector<8x384xf32>
    %85 = arith.addf %83, %84 : vector<8x384xf32>
    %86 = vector.extract_strided_slice %3 {offsets = [0, 1], sizes = [8, 1], strides = [1, 1]} : vector<8x4xf32> to vector<8x1xf32>
    %87 = vector.extract_strided_slice %78 {offsets = [1, 0], sizes = [1, 384], strides = [1, 1]} : vector<4x384xf32> to vector<1x384xf32>
    %88 = vector.broadcast %86 : vector<8x1xf32> to vector<8x384xf32>
    %89 = vector.broadcast %87 : vector<1x384xf32> to vector<8x384xf32>
    %90 = arith.mulf %88, %89 : vector<8x384xf32>
    %91 = arith.addf %85, %90 : vector<8x384xf32>
    %92 = vector.extract_strided_slice %3 {offsets = [0, 2], sizes = [8, 1], strides = [1, 1]} : vector<8x4xf32> to vector<8x1xf32>
    %93 = vector.extract_strided_slice %78 {offsets = [2, 0], sizes = [1, 384], strides = [1, 1]} : vector<4x384xf32> to vector<1x384xf32>
    %94 = vector.broadcast %92 : vector<8x1xf32> to vector<8x384xf32>
    %95 = vector.broadcast %93 : vector<1x384xf32> to vector<8x384xf32>
    %96 = arith.mulf %94, %95 : vector<8x384xf32>
    %97 = arith.addf %91, %96 : vector<8x384xf32>
    %98 = vector.extract_strided_slice %3 {offsets = [0, 3], sizes = [8, 1], strides = [1, 1]} : vector<8x4xf32> to vector<8x1xf32>
    %99 = vector.extract_strided_slice %78 {offsets = [3, 0], sizes = [1, 384], strides = [1, 1]} : vector<4x384xf32> to vector<1x384xf32>
    %100 = vector.broadcast %98 : vector<8x1xf32> to vector<8x384xf32>
    %101 = vector.broadcast %99 : vector<1x384xf32> to vector<8x384xf32>
    %102 = arith.mulf %100, %101 : vector<8x384xf32>
    %103 = arith.addf %97, %102 : vector<8x384xf32>
    %c0_11 = arith.constant 0 : index
    %c8 = arith.constant 8 : index
    %c0_12 = arith.constant 0 : index
    %104 = vector.load %arg5[%c0_11, %c8, %c0_12] : memref<1x16x384xf32, #tpu.memory_space<vmem>>, vector<1x8x384xf32>
    %105 = vector.shape_cast %104 : vector<1x8x384xf32> to vector<8x384xf32>
    %106 = vector.shape_cast %103 : vector<8x384xf32> to vector<1x8x384xf32>
    tpu.vector_store %arg5[%c0_11, %c8, %c0_12], %106 {strides = array<i32>} : memref<1x16x384xf32, #tpu.memory_space<vmem>>, vector<1x8x384xf32>,
    return
  }
  func.func @transform_0(%arg0: i32) -> (i32, i32, i32) {
    %c0_i32 = arith.constant 0 : i32
    %c0_i32_0 = arith.constant 0 : i32
    %c0_i32_1 = arith.constant 0 : i32
    return %arg0, %c0_i32, %c0_i32_0 : i32, i32, i32
  }
  func.func @transform_1(%arg0: i32) -> (i32, i32) {
    %c0_i32 = arith.constant 0 : i32
    %c0_i32_0 = arith.constant 0 : i32
    %c0_i32_1 = arith.constant 0 : i32
    return %c0_i32, %c0_i32_0 : i32, i32
  }
  func.func @transform_2(%arg0: i32) -> (i32, i32) {
    %c0_i32 = arith.constant 0 : i32
    %c0_i32_0 = arith.constant 0 : i32
    %c0_i32_1 = arith.constant 0 : i32
    return %c0_i32, %c0_i32_0 : i32, i32
  }
  func.func @transform_3(%arg0: i32) -> (i32, i32) {
    %c0_i32 = arith.constant 0 : i32
    %c0_i32_0 = arith.constant 0 : i32
    %c0_i32_1 = arith.constant 0 : i32
    return %c0_i32, %c0_i32_0 : i32, i32
  }
  func.func @transform_4(%arg0: i32) -> (i32, i32, i32) {
    %c0_i32 = arith.constant 0 : i32
    %c0_i32_0 = arith.constant 0 : i32
    %c0_i32_1 = arith.constant 0 : i32
    return %arg0, %c0_i32, %c0_i32_0 : i32, i32, i32
  }
}

</mosaic_0001>

<llo_original>
// kernel: tpu_custom_call.1
$region0: #{tpu_custom_call.1}
  #allocation0 [shape = 'u32[]', space=smem, size = 0x4, offset = 0x4, fixed_abs, tag = 'smem constant byte address 0x4 - core index']
  #allocation1 [shape = 'u32[144,128]{1,0:T(1,128)}', space=vmem, size = 0x12000, scoped, tag = 'internal scratch']
  %s0 = inlined_call_operand.hbm [shape: f32[1,8,432], index: 0, kind: input, shape index: {}]
  %s1 = inlined_call_operand.vmem [shape: f32[8,9], index: 1, kind: input, shape index: {}]
  %s2 = inlined_call_operand.vmem [shape: f32[8,4], index: 2, kind: input, shape index: {}]
  %s3 = inlined_call_operand.vmem [shape: f32[8,1], index: 3, kind: input, shape index: {}]
  %s4 = inlined_call_operand.hbm [shape: f32[1,16,384], index: 4, kind: output, shape index: {}]
  %s5 = sld [smem:[#allocation0]]
  $region30: #{tpu_custom_call.1} parent=0
    _
  %s7 = ssub.s32 1, %s5
  %s8 = scalar_select 0, %s7, %s5
  $region1: #{tpu_custom_call.1} parent=0
    #allocation2 [shape = 'u8[16384]{0}', space=vmem, size = 0x4000, scoped, tag = 'input window, operand 0, single buffered']
    #allocation3 [shape = 's32[1]{0}', space=sflag, size = 0x4, scoped, tag = 'scoped memory for tpu_custom_call.1']
    #allocation4 [shape = 's32[1]{0}', space=sflag, size = 0x4, scoped, tag = 'scoped memory for tpu_custom_call.1']
    #allocation5 [shape = 'u8[24576]{0}', space=vmem, size = 0x6000, scoped, tag = 'output window, operand 0, single buffered']
    %9 = vsyncpa [#allocation3], 0
    %10 = vsyncpa [#allocation4], 0
    // Predicated region
    $region2: #{tpu_custom_call.1} parent=1 // pred_check
      _
    $region3: #{tpu_custom_call.1} parent=1 // pred_check_branch
      %12 = sbr.rel (0) target = $region5
    $region4: #{tpu_custom_call.1} parent=1 // pred_region
      %s14 = ssub.s32 512, 512
      %15 = vsyncadd [#allocation3], %s14
      %s17 = sshll.u32 [#allocation2], 4
      %s18 = int_to_ptr.vmem [resolvable:$true] %s17
      %20 = dma.hbm_to_vmem [thread:$0]  %s0, 512, %s18, [#allocation3]
    $region5: #{tpu_custom_call.1} parent=1 // pred_fallthru
      _
    // Predicated region
    $region6: #{tpu_custom_call.1} parent=1 // pred_check
      _
    $region7: #{tpu_custom_call.1} parent=1 // pred_check_branch
      %22 = sbr.rel (0) target = $region9
    $region8: #{tpu_custom_call.1} parent=1 // pred_region
      _
    $region9: #{tpu_custom_call.1} parent=1 // pred_fallthru
      _
    // Predicated region
    $region10: #{tpu_custom_call.1} parent=1 // pred_check
      _
    $region11: #{tpu_custom_call.1} parent=1 // pred_check_branch
      %24 = sbr.rel (0) target = $region13
    $region12: #{tpu_custom_call.1} parent=1 // pred_region
      _
    $region13: #{tpu_custom_call.1} parent=1 // pred_fallthru
      _
    // Predicated region
    $region14: #{tpu_custom_call.1} parent=1 // pred_check
      _
    $region15: #{tpu_custom_call.1} parent=1 // pred_check_branch
      %26 = sbr.rel (0) target = $region17
    $region16: #{tpu_custom_call.1} parent=1 // pred_region
      _
    $region17: #{tpu_custom_call.1} parent=1 // pred_fallthru
      _
    // Predicated region
    $region18: #{tpu_custom_call.1} parent=1 // pred_check
      _
    $region19: #{tpu_custom_call.1} parent=1 // pred_check_branch
      %28 = sbr.rel (0) target = $region21
    $region20: #{tpu_custom_call.1} parent=1 // pred_region
      %29 = dma.done [#allocation3], 512
    $region21: #{tpu_custom_call.1} parent=1 // pred_fallthru
      _
    %v30 = vld [vmem:[#allocation2] sm:$0xff]
    %v31 = vld [vmem:[#allocation2 + $0x8] sm:$0xff]
    %v32 = vld [vmem:[#allocation2 + $0x10] sm:$0xff]
    %v33 = vld [vmem:[#allocation2 + $0x18] sm:$0xff]
    %v34 = vld [vmem:[%s1] sm:$0xff]
    %v35 = vld [vmem:[%s2] sm:$0xff]
    %v36 = vld [vmem:[%s3] sm:$0xff]
    %38 = vset.pattern.permute.xlu0 0
    %39 = vperm.xlu0 %38, %v34
    %v40 = vpop.permute.xlu0 %39
    %v42 = vmul.f32 %v30, %v40
    %v43 = vmul.f32 %v31, %v40
    %v44 = vmul.f32 %v32, %v40
    %45 = vset.pattern.permute.xlu0 1
    %46 = vperm.xlu0 %45, %v34
    %v47 = vpop.permute.xlu0 %46
    %v49 = vmul.f32 %v30, %v47
    %v50 = vmul.f32 %v31, %v47
    %v51 = vmul.f32 %v32, %v47
    %v52 = vmul.f32 %v33, %v47
    %57 = vrot.lane.b32.xlu0 %v49, 127
    %v58 = vpop.permute.xlu0 %57
    %59 = vrot.lane.b32.xlu0 %v50, 127
    %v60 = vpop.permute.xlu0 %59
    %61 = vrot.lane.b32.xlu0 %v51, 127
    %v62 = vpop.permute.xlu0 %61
    %63 = vrot.lane.b32.xlu0 %v52, 127
    %v64 = vpop.permute.xlu0 %63
    %vm65 = vcmask 1039360
    %v66 = vsel %vm65, %v58, %v60
    %v67 = vsel %vm65, %v60, %v62
    %v68 = vsel %vm65, %v62, %v64
    %v72 = vadd.f32 %v42, %v66
    %v73 = vadd.f32 %v43, %v67
    %v74 = vadd.f32 %v44, %v68
    %75 = vset.pattern.permute.xlu0 2
    %76 = vperm.xlu0 %75, %v34
    %v77 = vpop.permute.xlu0 %76
    %v79 = vmul.f32 %v30, %v77
    %v80 = vmul.f32 %v31, %v77
    %v81 = vmul.f32 %v32, %v77
    %v82 = vmul.f32 %v33, %v77
    %87 = vrot.lane.b32.xlu0 %v79, 126
    %v88 = vpop.permute.xlu0 %87
    %89 = vrot.lane.b32.xlu0 %v80, 126
    %v90 = vpop.permute.xlu0 %89
    %91 = vrot.lane.b32.xlu0 %v81, 126
    %v92 = vpop.permute.xlu0 %91
    %93 = vrot.lane.b32.xlu0 %v82, 126
    %v94 = vpop.permute.xlu0 %93
    %vm95 = vcmask 1031168
    %v96 = vsel %vm95, %v88, %v90
    %v97 = vsel %vm95, %v90, %v92
    %v98 = vsel %vm95, %v92, %v94
    %v102 = vadd.f32 %v72, %v96
    %v103 = vadd.f32 %v73, %v97
    %v104 = vadd.f32 %v74, %v98
    %105 = vset.pattern.permute.xlu0 3
    %106 = vperm.xlu0 %105, %v34
    %v107 = vpop.permute.xlu0 %106
    %v109 = vmul.f32 %v30, %v107
    %v110 = vmul.f32 %v31, %v107
    %v111 = vmul.f32 %v32, %v107
    %v112 = vmul.f32 %v33, %v107
    %117 = vrot.lane.b32.xlu0 %v109, 110
    %v118 = vpop.permute.xlu0 %117
    %119 = vrot.lane.b32.xlu0 %v110, 110
    %v120 = vpop.permute.xlu0 %119
    %121 = vrot.lane.b32.xlu0 %v111, 110
    %v122 = vpop.permute.xlu0 %121
    %123 = vrot.lane.b32.xlu0 %v112, 110
    %v124 = vpop.permute.xlu0 %123
    %vm125 = vcmask 900096
    %v126 = vsel %vm125, %v118, %v120
    %v127 = vsel %vm125, %v120, %v122
    %v128 = vsel %vm125, %v122, %v124
    %v132 = vadd.f32 %v102, %v126
    %v133 = vadd.f32 %v103, %v127
    %v134 = vadd.f32 %v104, %v128
    %135 = vset.pattern.permute.xlu0 4
    %136 = vperm.xlu0 %135, %v34
    %v137 = vpop.permute.xlu0 %136
    %v139 = vmul.f32 %v30, %v137
    %v140 = vmul.f32 %v31, %v137
    %v141 = vmul.f32 %v32, %v137
    %v142 = vmul.f32 %v33, %v137
    %147 = vrot.lane.b32.xlu0 %v139, 109
    %v148 = vpop.permute.xlu0 %147
    %149 = vrot.lane.b32.xlu0 %v140, 109
    %v150 = vpop.permute.xlu0 %149
    %151 = vrot.lane.b32.xlu0 %v141, 109
    %v152 = vpop.permute.xlu0 %151
    %153 = vrot.lane.b32.xlu0 %v142, 109
    %v154 = vpop.permute.xlu0 %153
    %vm155 = vcmask 891904
    %v156 = vsel %vm155, %v148, %v150
    %v157 = vsel %vm155, %v150, %v152
    %v158 = vsel %vm155, %v152, %v154
    %v162 = vadd.f32 %v132, %v156
    %v163 = vadd.f32 %v133, %v157
    %v164 = vadd.f32 %v134, %v158
    %165 = vset.pattern.permute.xlu0 5
    %166 = vperm.xlu0 %165, %v34
    %v167 = vpop.permute.xlu0 %166
    %v169 = vmul.f32 %v30, %v167
    %v170 = vmul.f32 %v31, %v167
    %v171 = vmul.f32 %v32, %v167
    %v172 = vmul.f32 %v33, %v167
    %177 = vrot.lane.b32.xlu0 %v169, 108
    %v178 = vpop.permute.xlu0 %177
    %179 = vrot.lane.b32.xlu0 %v170, 108
    %v180 = vpop.permute.xlu0 %179
    %181 = vrot.lane.b32.xlu0 %v171, 108
    %v182 = vpop.permute.xlu0 %181
    %183 = vrot.lane.b32.xlu0 %v172, 108
    %v184 = vpop.permute.xlu0 %183
    %vm185 = vcmask 883712
    %v186 = vsel %vm185, %v178, %v180
    %v187 = vsel %vm185, %v180, %v182
    %v188 = vsel %vm185, %v182, %v184
    %v192 = vadd.f32 %v162, %v186
    %v193 = vadd.f32 %v163, %v187
    %v194 = vadd.f32 %v164, %v188
    %195 = vset.pattern.permute.xlu0 6
    %196 = vperm.xlu0 %195, %v34
    %v197 = vpop.permute.xlu0 %196
    %v199 = vmul.f32 %v30, %v197
    %v200 = vmul.f32 %v31, %v197
    %v201 = vmul.f32 %v32, %v197
    %v202 = vmul.f32 %v33, %v197
    %207 = vrot.lane.b32.xlu0 %v199, 92
    %v208 = vpop.permute.xlu0 %207
    %209 = vrot.lane.b32.xlu0 %v200, 92
    %v210 = vpop.permute.xlu0 %209
    %211 = vrot.lane.b32.xlu0 %v201, 92
    %v212 = vpop.permute.xlu0 %211
    %213 = vrot.lane.b32.xlu0 %v202, 92
    %v214 = vpop.permute.xlu0 %213
    %vm215 = vcmask 752640
    %v216 = vsel %vm215, %v208, %v210
    %v217 = vsel %vm215, %v210, %v212
    %v218 = vsel %vm215, %v212, %v214
    %v222 = vadd.f32 %v192, %v216
    %v223 = vadd.f32 %v193, %v217
    %v224 = vadd.f32 %v194, %v218
    %225 = vset.pattern.permute.xlu0 7
    %226 = vperm.xlu0 %225, %v34
    %v227 = vpop.permute.xlu0 %226
    %v229 = vmul.f32 %v30, %v227
    %v230 = vmul.f32 %v31, %v227
    %v231 = vmul.f32 %v32, %v227
    %v232 = vmul.f32 %v33, %v227
    %237 = vrot.lane.b32.xlu0 %v229, 91
    %v238 = vpop.permute.xlu0 %237
    %239 = vrot.lane.b32.xlu0 %v230, 91
    %v240 = vpop.permute.xlu0 %239
    %241 = vrot.lane.b32.xlu0 %v231, 91
    %v242 = vpop.permute.xlu0 %241
    %243 = vrot.lane.b32.xlu0 %v232, 91
    %v244 = vpop.permute.xlu0 %243
    %vm245 = vcmask 744448
    %v246 = vsel %vm245, %v238, %v240
    %v247 = vsel %vm245, %v240, %v242
    %v248 = vsel %vm245, %v242, %v244
    %v252 = vadd.f32 %v222, %v246
    %v253 = vadd.f32 %v223, %v247
    %v254 = vadd.f32 %v224, %v248
    %255 = vset.pattern.permute.xlu0 8
    %256 = vperm.xlu0 %255, %v34
    %v257 = vpop.permute.xlu0 %256
    %v259 = vmul.f32 %v30, %v257
    %v260 = vmul.f32 %v31, %v257
    %v261 = vmul.f32 %v32, %v257
    %v262 = vmul.f32 %v33, %v257
    %267 = vrot.lane.b32.xlu0 %v259, 90
    %v268 = vpop.permute.xlu0 %267
    %269 = vrot.lane.b32.xlu0 %v260, 90
    %v270 = vpop.permute.xlu0 %269
    %271 = vrot.lane.b32.xlu0 %v261, 90
    %v272 = vpop.permute.xlu0 %271
    %273 = vrot.lane.b32.xlu0 %v262, 90
    %v274 = vpop.permute.xlu0 %273
    %vm275 = vcmask 736256
    %v276 = vsel %vm275, %v268, %v270
    %v277 = vsel %vm275, %v270, %v272
    %v278 = vsel %vm275, %v272, %v274
    %v282 = vadd.f32 %v252, %v276
    %v283 = vadd.f32 %v253, %v277
    %v284 = vadd.f32 %v254, %v278
    %286 = vset.pattern.permute.xlu0 0
    %287 = vperm.xlu0 %286, %v35
    %v288 = vpop.permute.xlu0 %287
    %v290 = vlaneseq
    %v291 = vshrl.u32 %v290, 7
    %v292 = vsub.s32 0, %v291
    %v293 = vrot.slane %v282, %v292
    %v294 = vlaneseq
    %v295 = vshrl.u32 %v294, 7
    %v296 = vsub.s32 0, %v295
    %v297 = vrot.slane %v283, %v296
    %v298 = vlaneseq
    %v299 = vshrl.u32 %v298, 7
    %v300 = vsub.s32 0, %v299
    %v301 = vrot.slane %v284, %v300
    %v302 = vmul.f32 %v288, %v293
    %v303 = vmul.f32 %v288, %v297
    %v304 = vmul.f32 %v288, %v301
    %306 = vset.pattern.permute.xlu0 0
    %307 = vperm.xlu0 %306, %v36
    %v308 = vpop.permute.xlu0 %307
    %v310 = vadd.f32 %v302, %v308
    %v311 = vadd.f32 %v303, %v308
    %v312 = vadd.f32 %v304, %v308
    %313 = vset.pattern.permute.xlu0 1
    %314 = vperm.xlu0 %313, %v35
    %v315 = vpop.permute.xlu0 %314
    %v317 = vlaneseq
    %v318 = vshrl.u32 %v317, 7
    %v319 = vsub.s32 1, %v318
    %v320 = vrot.slane %v282, %v319
    %v321 = vlaneseq
    %v322 = vshrl.u32 %v321, 7
    %v323 = vsub.s32 1, %v322
    %v324 = vrot.slane %v283, %v323
    %v325 = vlaneseq
    %v326 = vshrl.u32 %v325, 7
    %v327 = vsub.s32 1, %v326
    %v328 = vrot.slane %v284, %v327
    %v329 = vmul.f32 %v315, %v320
    %v330 = vmul.f32 %v315, %v324
    %v331 = vmul.f32 %v315, %v328
    %v332 = vadd.f32 %v310, %v329
    %v333 = vadd.f32 %v311, %v330
    %v334 = vadd.f32 %v312, %v331
    %335 = vset.pattern.permute.xlu0 2
    %336 = vperm.xlu0 %335, %v35
    %v337 = vpop.permute.xlu0 %336
    %v339 = vlaneseq
    %v340 = vshrl.u32 %v339, 7
    %v341 = vsub.s32 2, %v340
    %v342 = vrot.slane %v282, %v341
    %v343 = vlaneseq
    %v344 = vshrl.u32 %v343, 7
    %v345 = vsub.s32 2, %v344
    %v346 = vrot.slane %v283, %v345
    %v347 = vlaneseq
    %v348 = vshrl.u32 %v347, 7
    %v349 = vsub.s32 2, %v348
    %v350 = vrot.slane %v284, %v349
    %v351 = vmul.f32 %v337, %v342
    %v352 = vmul.f32 %v337, %v346
    %v353 = vmul.f32 %v337, %v350
    %v354 = vadd.f32 %v332, %v351
    %v355 = vadd.f32 %v333, %v352
    %v356 = vadd.f32 %v334, %v353
    %357 = vset.pattern.permute.xlu0 3
    %358 = vperm.xlu0 %357, %v35
    %v359 = vpop.permute.xlu0 %358
    %v361 = vlaneseq
    %v362 = vshrl.u32 %v361, 7
    %v363 = vsub.s32 3, %v362
    %v364 = vrot.slane %v282, %v363
    %v365 = vlaneseq
    %v366 = vshrl.u32 %v365, 7
    %v367 = vsub.s32 3, %v366
    %v368 = vrot.slane %v283, %v367
    %v369 = vlaneseq
    %v370 = vshrl.u32 %v369, 7
    %v371 = vsub.s32 3, %v370
    %v372 = vrot.slane %v284, %v371
    %v373 = vmul.f32 %v359, %v364
    %v374 = vmul.f32 %v359, %v368
    %v375 = vmul.f32 %v359, %v372
    %v376 = vadd.f32 %v354, %v373
    %v377 = vadd.f32 %v355, %v374
    %v378 = vadd.f32 %v356, %v375
    %379 = vst [vmem:[#allocation5] sm:$0xff] %v376
    %380 = vst [vmem:[#allocation5 + $0x8] sm:$0xff] %v377
    %381 = vst [vmem:[#allocation5 + $0x10] sm:$0xff] %v378
    %v382 = vlaneseq
    %v383 = vshrl.u32 %v382, 7
    %v384 = vsub.s32 4, %v383
    %v385 = vrot.slane %v282, %v384
    %v386 = vlaneseq
    %v387 = vshrl.u32 %v386, 7
    %v388 = vsub.s32 4, %v387
    %v389 = vrot.slane %v283, %v388
    %v390 = vlaneseq
    %v391 = vshrl.u32 %v390, 7
    %v392 = vsub.s32 4, %v391
    %v393 = vrot.slane %v284, %v392
    %v394 = vmul.f32 %v288, %v385
    %v395 = vmul.f32 %v288, %v389
    %v396 = vmul.f32 %v288, %v393
    %v397 = vadd.f32 %v394, %v308
    %v398 = vadd.f32 %v395, %v308
    %v399 = vadd.f32 %v396, %v308
    %v400 = vlaneseq
    %v401 = vshrl.u32 %v400, 7
    %v402 = vsub.s32 5, %v401
    %v403 = vrot.slane %v282, %v402
    %v404 = vlaneseq
    %v405 = vshrl.u32 %v404, 7
    %v406 = vsub.s32 5, %v405
    %v407 = vrot.slane %v283, %v406
    %v408 = vlaneseq
    %v409 = vshrl.u32 %v408, 7
    %v410 = vsub.s32 5, %v409
    %v411 = vrot.slane %v284, %v410
    %v412 = vmul.f32 %v315, %v403
    %v413 = vmul.f32 %v315, %v407
    %v414 = vmul.f32 %v315, %v411
    %v415 = vadd.f32 %v397, %v412
    %v416 = vadd.f32 %v398, %v413
    %v417 = vadd.f32 %v399, %v414
    %v418 = vlaneseq
    %v419 = vshrl.u32 %v418, 7
    %v420 = vsub.s32 6, %v419
    %v421 = vrot.slane %v282, %v420
    %v422 = vlaneseq
    %v423 = vshrl.u32 %v422, 7
    %v424 = vsub.s32 6, %v423
    %v425 = vrot.slane %v283, %v424
    %v426 = vlaneseq
    %v427 = vshrl.u32 %v426, 7
    %v428 = vsub.s32 6, %v427
    %v429 = vrot.slane %v284, %v428
    %v430 = vmul.f32 %v337, %v421
    %v431 = vmul.f32 %v337, %v425
    %v432 = vmul.f32 %v337, %v429
    %v433 = vadd.f32 %v415, %v430
    %v434 = vadd.f32 %v416, %v431
    %v435 = vadd.f32 %v417, %v432
    %v436 = vlaneseq
    %v437 = vshrl.u32 %v436, 7
    %v438 = vsub.s32 7, %v437
    %v439 = vrot.slane %v282, %v438
    %v440 = vlaneseq
    %v441 = vshrl.u32 %v440, 7
    %v442 = vsub.s32 7, %v441
    %v443 = vrot.slane %v283, %v442
    %v444 = vlaneseq
    %v445 = vshrl.u32 %v444, 7
    %v446 = vsub.s32 7, %v445
    %v447 = vrot.slane %v284, %v446
    %v448 = vmul.f32 %v359, %v439
    %v449 = vmul.f32 %v359, %v443
    %v450 = vmul.f32 %v359, %v447
    %v451 = vadd.f32 %v433, %v448
    %v452 = vadd.f32 %v434, %v449
    %v453 = vadd.f32 %v435, %v450
    %454 = vst [vmem:[#allocation5 + $0x18] sm:$0xff] %v451
    %455 = vst [vmem:[#allocation5 + $0x20] sm:$0xff] %v452
    %456 = vst [vmem:[#allocation5 + $0x28] sm:$0xff] %v453
    // Predicated region
    $region22: #{tpu_custom_call.1} parent=1 // pred_check
      _
    $region23: #{tpu_custom_call.1} parent=1 // pred_check_branch
      %458 = sbr.rel (0) target = $region25
    $region24: #{tpu_custom_call.1} parent=1 // pred_region
      %s460 = ssub.s32 768, 768
      %461 = vsyncadd [#allocation4], %s460
      %s462 = sshll.u32 [#allocation5], 4
      %s463 = int_to_ptr.vmem [resolvable:$true] %s462
      %468 = dma.vmem_to_hbm [thread:$0]  %s463, 768, %s4, [#allocation4], 384, 384, 24
    $region25: #{tpu_custom_call.1} parent=1 // pred_fallthru
      _
    // Predicated region
    $region26: #{tpu_custom_call.1} parent=1 // pred_check
      _
    $region27: #{tpu_custom_call.1} parent=1 // pred_check_branch
      %470 = sbr.rel (0) target = $region29
    $region28: #{tpu_custom_call.1} parent=1 // pred_region
      %471 = dma.done [#allocation4], 768
    $region29: #{tpu_custom_call.1} parent=1 // pred_fallthru
      _
    %472 = vsyncpa [#allocation3], 1
    %473 = vsyncpa [#allocation4], 1

</llo_original>
